<compile_context>
chip_gen: v7x
topology: tpu7x:2x2x1
jax: 0.10.0
libtpu: 0.0.40
codegen_flags: <defaults>
</compile_context>

<pallas_src>
import jax
import jax.numpy as jnp
from jax.experimental import pallas as pl
from jax.experimental.pallas import tpu as pltpu


def _weight_net_fused_kernel(x_ref, w_ref, b_ref, o_ref):
    # x_ref: (tm, K)  w_ref: (K, Np) resident  b_ref: (1, Np) f32  o_ref: (tm, Np) f32
    z = jnp.dot(x_ref[...], w_ref[...], preferred_element_type=jnp.float32)
    # exp / reciprocal inside sigmoid land on the EUP slot, off the VALU path.
    o_ref[...] = jax.nn.sigmoid(z + b_ref[...])


def _weight_net_tiled_kernel(x_ref, w_ref, b_ref, o_ref):
    # x_ref: (tm, tk)  w_ref: (tk, tn)  b_ref: (1, tn) f32  o_ref: (tm, tn) f32
    # o_ref's block index is constant across the K axis -> resident accumulator.
    k = pl.program_id(2)

    @pl.when(k == 0)
    def _init():
        o_ref[...] = jnp.zeros_like(o_ref)

    o_ref[...] += jnp.dot(
        x_ref[...], w_ref[...], preferred_element_type=jnp.float32
    )

    @pl.when(k == pl.num_programs(2) - 1)
    def _finalize():
        o_ref[...] = jax.nn.sigmoid(o_ref[...] + b_ref[...])


def _round_up(x, m):
    return ((x + m - 1) // m) * m


def _vmem_limit_bytes():
    # Per-generation scoped-VMEM budget with headroom for internal scratch:
    # ~96 MiB on v5e/v6e (128 MiB physical), ~48 MiB on v7x (64 MiB physical).
    try:
        cap = int(pltpu.get_tpu_info().vmem_capacity_bytes)
    except Exception:
        cap = 64 * 1024 * 1024
    return max(32 * 1024 * 1024, min((cap * 3) // 4, 96 * 1024 * 1024))


def weight_net(x, w, b, *, compute_dtype=jnp.bfloat16,
               tm_pref=512, tn_pref=512, tk_pref=1024,
               weight_resident_bytes=4 * 1024 * 1024):
    """Forward of Weight_Net: sigmoid(x @ w.T + b).

    x: (B, K); w: (N, K) PyTorch layout (out_features, in_features); b: (N,).
    compute_dtype: dtype fed to the MXU (accumulation/epilogue always f32).
    """
    B, K = x.shape
    N, K2 = w.shape
    assert K == K2, "weight in_features must match x feature dim"
    out_dtype = x.dtype
    cdt = jnp.dtype(compute_dtype) if compute_dtype is not None else jnp.dtype(x.dtype)
    dsize = cdt.itemsize
    vmem_limit = _vmem_limit_bytes()

    # ---- wrapper-side layout plumbing (outside the kernel) -----------------
    xc = x.astype(cdt)
    wt = jnp.transpose(w).astype(cdt)          # (K, N): kernel never transposes
    bf = b.astype(jnp.float32)

    # Lane-dense output: pad the feature axis up to a multiple of the N tile.
    tn = min(tn_pref, _round_up(N, 128))
    Np = _round_up(N, tn)
    gn = Np // tn
    if Np != N:
        wt = jnp.pad(wt, ((0, 0), (0, Np - N)))
        bf = jnp.pad(bf, (0, Np - N))
    b2d = bf.reshape(1, Np)

    # M tiling: pad B to the tile instead of hunting for divisors.
    tm = min(tm_pref, _round_up(B, 8))
    if gn == 1 and B >= 16 and _round_up(B, tm) // tm == 1:
        # Guarantee >= 2 parallel blocks so both v7x TensorCores get work.
        tm = _round_up(-(-B // 2), 8)

    # ---- weight-resident fast path? -----------------------------------------
    w_bytes = K * Np * dsize
    fast = w_bytes <= weight_resident_bytes
    if fast:
        while tm > 8 and (w_bytes + 2 * tm * K * dsize + 2 * tm * Np * 4
                          > int(0.6 * vmem_limit)):
            tm = _round_up(tm // 2, 8)
        if (w_bytes + 2 * tm * K * dsize + 2 * tm * Np * 4
                > int(0.6 * vmem_limit)):
            fast = False

    B_pad = _round_up(B, tm)
    if B_pad != B:
        xc = jnp.pad(xc, ((0, B_pad - B), (0, 0)))
    gm = B_pad // tm

    if fast:
        # Single-pass GEMM + sigmoid; weight and bias DMA'd once and kept
        # resident in VMEM (constant index_map), grid only over M.
        out_p = pl.pallas_call(
            _weight_net_fused_kernel,
            out_shape=jax.ShapeDtypeStruct((B_pad, Np), jnp.float32),
            grid_spec=pltpu.PrefetchScalarGridSpec(
                num_scalar_prefetch=0,
                grid=(gm,),
                in_specs=[
                    pl.BlockSpec((tm, K), lambda i: (i, 0)),   # x row tile
                    pl.BlockSpec((K, Np), lambda i: (0, 0)),   # resident weight
                    pl.BlockSpec((1, Np), lambda i: (0, 0)),   # resident bias
                ],
                out_specs=pl.BlockSpec((tm, Np), lambda i: (i, 0)),
            ),
            compiler_params=pltpu.CompilerParams(
                dimension_semantics=("parallel",),
                vmem_limit_bytes=vmem_limit,
            ),
        )(xc, wt, b2d)
    else:
        # K-tiled accumulator path for large weights.
        tk = min(tk_pref, _round_up(K, 128))
        while tk > 128 and (2 * (tm * tk + tk * tn) * dsize + 2 * tm * tn * 4
                            > int(0.6 * vmem_limit)):
            tk = _round_up(tk // 2, 128)
        K_pad = _round_up(K, tk)
        if K_pad != K:
            xc = jnp.pad(xc, ((0, 0), (0, K_pad - K)))
            wt = jnp.pad(wt, ((0, K_pad - K), (0, 0)))
        gk = K_pad // tk

        out_p = pl.pallas_call(
            _weight_net_tiled_kernel,
            out_shape=jax.ShapeDtypeStruct((B_pad, Np), jnp.float32),
            grid_spec=pltpu.PrefetchScalarGridSpec(
                num_scalar_prefetch=0,
                grid=(gm, gn, gk),
                in_specs=[
                    pl.BlockSpec((tm, tk), lambda i, j, k: (i, k)),   # x tile
                    pl.BlockSpec((tk, tn), lambda i, j, k: (k, j)),   # w tile
                    pl.BlockSpec((1, tn), lambda i, j, k: (0, j)),    # bias
                ],
                out_specs=pl.BlockSpec((tm, tn), lambda i, j, k: (i, j)),
            ),
            compiler_params=pltpu.CompilerParams(
                dimension_semantics=("parallel", "parallel", "arbitrary"),
                vmem_limit_bytes=vmem_limit,
            ),
        )(xc, wt, b2d)

    return out_p[:B, :N].astype(out_dtype)


if __name__ == "__main__":
    key = jax.random.PRNGKey(0)
    k_x, k_w, k_b = jax.random.split(key, 3)

    batch, hid = 8, 32

    # PyTorch Linear default init: U(-1/sqrt(hid), 1/sqrt(hid))
    bound = 1.0 / (hid ** 0.5)
    w = jax.random.uniform(k_w, (hid, hid), jnp.float32, -bound, bound)  # (out, in)
    b = jax.random.uniform(k_b, (hid,), jnp.float32, -bound, bound)
    x = jax.random.normal(k_x, (batch, hid), jnp.float32)

    # Reference in plain JAX (f32)
    ref = jax.nn.sigmoid(x @ w.T + b)

    # 1) Exact-precision path (f32 MXU inputs) — weight-resident fast kernel.
    out_f32 = weight_net(x, w, b, compute_dtype=jnp.float32)
    jax.block_until_ready(out_f32)
    assert out_f32.shape == ref.shape, "shape mismatch vs reference"
    assert jnp.allclose(out_f32, ref, atol=1e-5), "f32 path mismatch vs reference"

    # 2) Default bf16-MXU path (f32 accumulation + epilogue).
    out_bf16 = weight_net(x, w, b)
    jax.block_until_ready(out_bf16)
    assert jnp.allclose(out_bf16, ref, atol=2e-2), "bf16 path mismatch vs reference"

    # 3) Force the K-tiled accumulator path to exercise it as well.
    out_tiled = weight_net(x, w, b, compute_dtype=jnp.float32,
                           weight_resident_bytes=0)
    jax.block_until_ready(out_tiled)
    assert jnp.allclose(out_tiled, ref, atol=1e-5), "tiled path mismatch vs reference"

    print("KERNEL_OK")
</pallas_src>

<mosaic_0001>
module attributes {stable_mosaic.version = 11 : i64} {
  func.func @_weight_net_fused_kernel(%arg0: i32, %arg1: memref<8x32xf32, #tpu.memory_space<vmem>>, %arg2: memref<32x128xf32, #tpu.memory_space<vmem>>, %arg3: memref<1x128xf32, #tpu.memory_space<vmem>>, %arg4: memref<8x128xf32, #tpu.memory_space<vmem>>) attributes {dimension_semantics = [#tpu.dimension_semantics<parallel>], iteration_bounds = array<i64: 1>, scalar_prefetch = 0 : i64, scratch_operands = 0 : i64, tpu.core_type = #tpu.core_type<tc>, window_params = [{transform_indices = @transform_0, window_bounds = array<i64: 8, 32>}, {pipeline_mode = #tpu.pipeline_mode<synchronous>, transform_indices = @transform_1, window_bounds = array<i64: 32, 128>}, {pipeline_mode = #tpu.pipeline_mode<synchronous>, transform_indices = @transform_2, window_bounds = array<i64: 1, 128>}, {transform_indices = @transform_3, window_bounds = array<i64: 8, 128>}]} {
    %c0 = arith.constant 0 : index
    %c0_0 = arith.constant 0 : index
    %0 = vector.load %arg1[%c0, %c0_0] : memref<8x32xf32, #tpu.memory_space<vmem>>, vector<8x32xf32>
    %c0_1 = arith.constant 0 : index
    %c0_2 = arith.constant 0 : index
    %1 = vector.load %arg2[%c0_1, %c0_2] : memref<32x128xf32, #tpu.memory_space<vmem>>, vector<32x128xf32>
    %cst = arith.constant dense<0.000000e+00> : vector<8x128xf32>
    %2 = tpu.matmul %0, %1, %cst {dimension_numbers = #tpu.dot_dimension_numbers<[1], [0], [0], [1], [0, 0, 1, 1], [], []>} : vector<8x32xf32>, vector<32x128xf32>, vector<8x128xf32> -> vector<8x128xf32>
    %c0_3 = arith.constant 0 : index
    %c0_4 = arith.constant 0 : index
    %3 = vector.load %arg3[%c0_3, %c0_4] : memref<1x128xf32, #tpu.memory_space<vmem>>, vector<1x128xf32>
    %4 = vector.broadcast %3 : vector<1x128xf32> to vector<8x128xf32>
    %5 = arith.addf %2, %4 : vector<8x128xf32>
    %6 = arith.negf %5 : vector<8x128xf32>
    %7 = math.exp %6 : vector<8x128xf32>
    %cst_5 = arith.constant 1.000000e+00 : f32
    %8 = vector.broadcast %cst_5 : f32 to vector<8x128xf32>
    %9 = arith.addf %8, %7 : vector<8x128xf32>
    %10 = arith.divf %8, %9 : vector<8x128xf32>
    %c0_6 = arith.constant 0 : index
    %c0_7 = arith.constant 0 : index
    %11 = vector.load %arg4[%c0_6, %c0_7] : memref<8x128xf32, #tpu.memory_space<vmem>>, vector<8x128xf32>
    tpu.vector_store %arg4[%c0_6, %c0_7], %10 {strides = array<i32>} : memref<8x128xf32, #tpu.memory_space<vmem>>, vector<8x128xf32>,
    return
  }
  func.func @transform_0(%arg0: i32) -> (i32, i32) {
    %c0_i32 = arith.constant 0 : i32
    %c0_i32_0 = arith.constant 0 : i32
    return %arg0, %c0_i32 : i32, i32
  }
  func.func @transform_1(%arg0: i32) -> (i32, i32) {
    %c0_i32 = arith.constant 0 : i32
    %c0_i32_0 = arith.constant 0 : i32
    %c0_i32_1 = arith.constant 0 : i32
    return %c0_i32, %c0_i32_0 : i32, i32
  }
  func.func @transform_2(%arg0: i32) -> (i32, i32) {
    %c0_i32 = arith.constant 0 : i32
    %c0_i32_0 = arith.constant 0 : i32
    %c0_i32_1 = arith.constant 0 : i32
    return %c0_i32, %c0_i32_0 : i32, i32
  }
  func.func @transform_3(%arg0: i32) -> (i32, i32) {
    %c0_i32 = arith.constant 0 : i32
    %c0_i32_0 = arith.constant 0 : i32
    return %arg0, %c0_i32 : i32, i32
  }
}

</mosaic_0001>

<llo_original>
// kernel: tpu_custom_call.1
$region0: #{tpu_custom_call.1}
  #allocation0 [shape = 'u32[]', space=smem, size = 0x4, offset = 0x4, fixed_abs, tag = 'smem constant byte address 0x4 - core index']
  #allocation1 [shape = 'u32[144,128]{1,0:T(1,128)}', space=vmem, size = 0x12000, scoped, tag = 'internal scratch']
  %s0 = inlined_call_operand.hbm [shape: f32[8,32], index: 0, kind: input, shape index: {}]
  %s1 = inlined_call_operand.hbm [shape: f32[32,128], index: 1, kind: input, shape index: {}]
  %s2 = inlined_call_operand.vmem [shape: f32[1,128], index: 2, kind: input, shape index: {}]
  %s3 = inlined_call_operand.hbm [shape: f32[8,128], index: 3, kind: output, shape index: {}]
  %s4 = sld [smem:[#allocation0]]
  $region30: #{tpu_custom_call.1} parent=0
    _
  %s6 = ssub.s32 1, %s4
  %s7 = scalar_select 0, %s6, %s4
  $region1: #{tpu_custom_call.1} parent=0
    #allocation2 [shape = 'u8[4096]{0}', space=vmem, size = 0x1000, scoped, tag = 'input window, operand 0, single buffered']
    #allocation3 [shape = 's32[1]{0}', space=sflag, size = 0x4, scoped, tag = 'scoped memory for tpu_custom_call.1']
    #allocation4 [shape = 's32[1]{0}', space=sflag, size = 0x4, scoped, tag = 'scoped memory for tpu_custom_call.1']
    #allocation5 [shape = 'u8[16384]{0}', space=vmem, size = 0x4000, scoped, tag = 'input window, operand 1, single buffered']
    #allocation6 [shape = 's32[1]{0}', space=sflag, size = 0x4, scoped, tag = 'scoped memory for tpu_custom_call.1']
    #allocation7 [shape = 'u8[4096]{0}', space=vmem, size = 0x1000, scoped, tag = 'output window, operand 0, single buffered']
    %8 = vsyncpa [#allocation3], 0
    %9 = vsyncpa [#allocation6], 0
    %10 = vsyncpa [#allocation4], 0
    // Predicated region
    $region2: #{tpu_custom_call.1} parent=1 // pred_check
      _
    $region3: #{tpu_custom_call.1} parent=1 // pred_check_branch
      %12 = sbr.rel (0) target = $region5
    $region4: #{tpu_custom_call.1} parent=1 // pred_region
      %s14 = ssub.s32 128, 128
      %15 = vsyncadd [#allocation3], %s14
      %s17 = sshll.u32 [#allocation2], 4
      %s18 = int_to_ptr.vmem [resolvable:$true] %s17
      %20 = dma.hbm_to_vmem [thread:$0]  %s0, 128, %s18, [#allocation3]
    $region5: #{tpu_custom_call.1} parent=1 // pred_fallthru
      _
    // Predicated region
    $region6: #{tpu_custom_call.1} parent=1 // pred_check
      _
    $region7: #{tpu_custom_call.1} parent=1 // pred_check_branch
      %22 = sbr.rel (0) target = $region9
    $region8: #{tpu_custom_call.1} parent=1 // pred_region
      %s24 = ssub.s32 512, 512
      %25 = vsyncadd [#allocation6], %s24
      %s26 = sshll.u32 [#allocation5], 4
      %s27 = int_to_ptr.vmem [resolvable:$true] %s26
      %32 = dma.hbm_to_vmem [thread:$0]  %s1, 512, %s27, [#allocation6], 128, 128, 8
    $region9: #{tpu_custom_call.1} parent=1 // pred_fallthru
      _
    // Predicated region
    $region10: #{tpu_custom_call.1} parent=1 // pred_check
      _
    $region11: #{tpu_custom_call.1} parent=1 // pred_check_branch
      %34 = sbr.rel (0) target = $region13
    $region12: #{tpu_custom_call.1} parent=1 // pred_region
      _
    $region13: #{tpu_custom_call.1} parent=1 // pred_fallthru
      _
    // Predicated region
    $region14: #{tpu_custom_call.1} parent=1 // pred_check
      _
    $region15: #{tpu_custom_call.1} parent=1 // pred_check_branch
      %36 = sbr.rel (0) target = $region17
    $region16: #{tpu_custom_call.1} parent=1 // pred_region
      %37 = dma.done [#allocation3], 128
    $region17: #{tpu_custom_call.1} parent=1 // pred_fallthru
      _
    // Predicated region
    $region18: #{tpu_custom_call.1} parent=1 // pred_check
      _
    $region19: #{tpu_custom_call.1} parent=1 // pred_check_branch
      %39 = sbr.rel (0) target = $region21
    $region20: #{tpu_custom_call.1} parent=1 // pred_region
      %40 = dma.done [#allocation6], 512
    $region21: #{tpu_custom_call.1} parent=1 // pred_fallthru
      _
    %v41 = vld [vmem:[#allocation2] sm:$0xff]
    %v42 = vld [vmem:[#allocation5] sm:$0xff]
    %v43 = vld [vmem:[#allocation5 + $0x8] sm:$0xff]
    %v44 = vld [vmem:[#allocation5 + $0x10] sm:$0xff]
    %v45 = vld [vmem:[#allocation5 + $0x18] sm:$0xff]
    %v46 = vld [vmem:[%s2] sm:$0x1]
    %v48 = vlaneseq
    %v49 = vshrl.u32 %v48, 7
    %v50 = vsub.s32 0, %v49
    %v51 = vrot.slane %v46, %v50
    %vm53 = vcmask 261120
    %v55 = vsel %vm53, %v41, 0
    %57 = vmatprep.subr.mxu0 0.0
    %58 = vmatpush1.msra.mxu0 %v42
    %59 = vmatprep.subr.mxu0 0.0
    %60 = vmatpush1.msra.mxu0 %v43
    %61 = vmatprep.subr.mxu0 0.0
    %62 = vmatpush1.msra.mxu0 %v44
    %63 = vmatprep.subr.mxu0 0.0
    %64 = vmatpush1.msra.mxu0 %v45
    %65 = vmatprep.subr.mxu0 0.0
    %66 = vmatpush1.msra.mxu0 0.0
    %67 = vmatprep.subr.mxu0 0.0
    %68 = vmatpush1.msra.mxu0 0.0
    %69 = vmatprep.subr.mxu0 0.0
    %70 = vmatpush1.msra.mxu0 0.0
    %71 = vmatprep.subr.mxu0 0.0
    %72 = vmatpush1.msra.mxu0 0.0
    %73 = vmatprep.subr.mxu0 0.0
    %74 = vmatpush1.msra.mxu0 0.0
    %75 = vmatprep.subr.mxu0 0.0
    %76 = vmatpush1.msra.mxu0 0.0
    %77 = vmatprep.subr.mxu0 0.0
    %78 = vmatpush1.msra.mxu0 0.0
    %79 = vmatprep.subr.mxu0 0.0
    %80 = vmatpush1.msra.mxu0 0.0
    %81 = vmatprep.subr.mxu0 0.0
    %82 = vmatpush1.msra.mxu0 0.0
    %83 = vmatprep.subr.mxu0 0.0
    %84 = vmatpush1.msra.mxu0 0.0
    %85 = vmatprep.subr.mxu0 0.0
    %86 = vmatpush1.msra.mxu0 0.0
    %87 = vmatprep.subr.mxu0 0.0
    %88 = vmatpush1.msra.mxu0 0.0
    %89 = vmatprep.subr.mxu0 0.0
    %90 = vmatpush1.msra.mxu0 0.0
    %91 = vmatprep.subr.mxu0 0.0
    %92 = vmatpush1.msra.mxu0 0.0
    %93 = vmatprep.subr.mxu0 0.0
    %94 = vmatpush1.msra.mxu0 0.0
    %95 = vmatprep.subr.mxu0 0.0
    %96 = vmatpush1.msra.mxu0 0.0
    %97 = vmatprep.subr.mxu0 0.0
    %98 = vmatpush1.msra.mxu0 0.0
    %99 = vmatprep.subr.mxu0 0.0
    %100 = vmatpush1.msra.mxu0 0.0
    %101 = vmatprep.subr.mxu0 0.0
    %102 = vmatpush1.msra.mxu0 0.0
    %103 = vmatprep.subr.mxu0 0.0
    %104 = vmatpush1.msra.mxu0 0.0
    %105 = vmatprep.subr.mxu0 0.0
    %106 = vmatpush1.msra.mxu0 0.0
    %107 = vmatprep.subr.mxu0 0.0
    %108 = vmatpush1.msra.mxu0 0.0
    %109 = vmatprep.subr.mxu0 0.0
    %110 = vmatpush1.msra.mxu0 0.0
    %111 = vmatprep.subr.mxu0 0.0
    %112 = vmatpush1.msra.mxu0 0.0
    %113 = vmatprep.subr.mxu0 0.0
    %114 = vmatpush1.msra.mxu0 0.0
    %115 = vmatprep.subr.mxu0 0.0
    %116 = vmatpush1.msra.mxu0 0.0
    %117 = vmatprep.subr.mxu0 0.0
    %118 = vmatpush1.msra.mxu0 0.0
    %119 = vmatprep.subr.mxu0 0.0
    %120 = vmatpush1.msra.mxu0 0.0
    %121 = vmatprep.mubr.f32.mxu0 0.0
    %122 = vmatmul.mubr.f32.gmra.mrb[0].mxu0 %v55
    %v123 = vpop.f32.mrb[0].mxu0
    %v124 = vadd.f32 %v51, %v123
    %v125 = vpop.f32.mrb[0].mxu0
    %126 = vdwg.mxu0
    %v127 = vxor.u32 %v124, 2147483648
    %v128 = vmul.f32 %v127, 1.442695
    %v129 = vpow.pop %v128
    %v130 = vadd.f32 %v129, 1.0
    %v131 = vrcp.pop %v130
    %v132 = vmul.f32 1.0, %v131
    %133 = vst [vmem:[#allocation7] sm:$0xff] %v132
    // Predicated region
    $region22: #{tpu_custom_call.1} parent=1 // pred_check
      _
    $region23: #{tpu_custom_call.1} parent=1 // pred_check_branch
      %135 = sbr.rel (0) target = $region25
    $region24: #{tpu_custom_call.1} parent=1 // pred_region
      %s137 = ssub.s32 128, 128
      %138 = vsyncadd [#allocation4], %s137
      %s140 = sshll.u32 [#allocation7], 4
      %s141 = int_to_ptr.vmem [resolvable:$true] %s140
      %143 = dma.vmem_to_hbm [thread:$0]  %s141, 128, %s3, [#allocation4]
    $region25: #{tpu_custom_call.1} parent=1 // pred_fallthru
      _
    // Predicated region
    $region26: #{tpu_custom_call.1} parent=1 // pred_check
      _
    $region27: #{tpu_custom_call.1} parent=1 // pred_check_branch
      %145 = sbr.rel (0) target = $region29
    $region28: #{tpu_custom_call.1} parent=1 // pred_region
      %146 = dma.done [#allocation4], 128
    $region29: #{tpu_custom_call.1} parent=1 // pred_fallthru
      _
    %147 = vsyncpa [#allocation3], 1
    %148 = vsyncpa [#allocation6], 1
    %149 = vsyncpa [#allocation4], 1

</llo_original>
